<compile_context>
chip_gen: v5e
topology: v5e:2x2
jax: 0.10.0
libtpu: 0.0.40
codegen_flags: <defaults>
</compile_context>

<pallas_src>
import jax
import jax.numpy as jnp
from jax.experimental import pallas as pl
from jax.experimental.pallas import tpu as pltpu


def _round_up(x, m):
    return ((x + m - 1) // m) * m


_BLOCK_BUDGET = 28 * 1024 * 1024   # bytes of VMEM allowed for pipelined blocks/temps
_VMEM_LIMIT = 48 * 1024 * 1024     # scoped VMEM limit (fits v7x's 64 MiB physical)


def _choose_tiles(T, H, Bp0, weight_bytes, extra_copies):
    """Pick (TB, Tc, T_pad) from a VMEM budget.

    TB: batch tile (multiple of 8).  Tc: sequence chunk per grid step.
    T_pad: padded sequence length (multiple of 128) of the resident score slab.
    """
    T_pad = _round_up(max(T, 1), 128)
    budget = max(_BLOCK_BUDGET - 2 * weight_bytes, 2 * 1024 * 1024)

    # Prefer >= 2 batch tiles when the batch allows it (keeps both v7x TCs busy).
    tb_cap = Bp0 if Bp0 <= 8 else min(_round_up(Bp0 // 2, 8), 512)

    def bytes_needed(tb, tc):
        enc = (2 + extra_copies) * tc * tb * H * 4   # dbl-buffered chunk + f32 temps
        hid = 2 * tb * H * 4
        out = 2 * tb * T_pad * 4                     # resident lane-dense score slab
        return enc + hid + out

    tc_cands = [c for c in (512, 256, 128, 64, 32, 16, 8)
                if c <= T_pad and T_pad % c == 0]
    best = None
    for tb in range(8, tb_cap + 1, 8):
        for tc in tc_cands:
            if bytes_needed(tb, tc) <= budget:
                key = (tc >= 128, tb * tc, tc)       # prefer lane-dense, then volume
                if best is None or key > best[0]:
                    best = (key, tb, tc)
    if best is None:
        TB, Tc = 8, tc_cands[-1]                     # minimal tiles; best effort
    else:
        TB, Tc = best[1], best[2]
    return TB, Tc, T_pad


# -----------------------------------------------------------------------------
# In-kernel helpers.
#   out_ref: resident (nT, TB, Tc) score slab (same block for every seq chunk).
# -----------------------------------------------------------------------------

def _store_chunk(out_ref, s_bt, t, seq_len):
    """Write the (TB, Tc) batch-major score chunk, masking padded positions."""
    Tc = s_bt.shape[1]
    col = t * Tc + jax.lax.broadcasted_iota(jnp.int32, s_bt.shape, 1)
    out_ref[t] = jnp.where(col < seq_len, s_bt, -jnp.inf)


def _finalize_softmax(out_ref, approx):
    """On the last chunk, softmax over the full (padded) sequence in place."""
    @pl.when(pl.program_id(1) == pl.num_programs(1) - 1)
    def _():
        x = out_ref[...]                                  # (nT, TB, Tc) f32
        m = jnp.max(x, axis=(0, 2), keepdims=True)        # (1, TB, 1)
        e = jnp.exp(x - m)
        denom = jnp.sum(e, axis=(0, 2), keepdims=True)
        out_ref[...] = e * pl.reciprocal(denom, approx=approx)


# -----------------------------------------------------------------------------
# Kernels (one seq chunk per grid step).
#   hid_ref: (1, TB, H)   enc_ref: (Tc, TB, H)   out_ref: (nT, TB, Tc)
# -----------------------------------------------------------------------------

def _make_dot_kernel(seq_len, fast):
    def kernel(hid_ref, enc_ref, out_ref):
        t = pl.program_id(1)
        hid = hid_ref[0].astype(jnp.float32)                      # (TB, H)
        enc = enc_ref[...].astype(jnp.float32)                    # (Tc, TB, H)
        s = jnp.sum(hid[None, :, :] * enc, axis=-1).T             # (TB, Tc)
        _store_chunk(out_ref, s, t, seq_len)
        _finalize_softmax(out_ref, fast)
    return kernel


def _make_general_kernel(seq_len, fast):
    mx = jnp.bfloat16 if fast else jnp.float32
    def kernel(hid_ref, enc_ref, w_ref, b_ref, out_ref):
        t = pl.program_id(1)
        hid = hid_ref[0]                                          # (TB, H)
        # score = sum_h hid*(enc@W.T + b) == sum_k (hid@W)*enc + hid.b
        hp = jnp.dot(hid.astype(mx), w_ref[...].astype(mx),
                     preferred_element_type=jnp.float32)          # (TB, H)  MXU
        hb = jnp.sum(hid.astype(jnp.float32) * b_ref[...].astype(jnp.float32),
                     axis=-1, keepdims=True)                      # (TB, 1)
        enc = enc_ref[...].astype(jnp.float32)                    # (Tc, TB, H)
        s = jnp.sum(hp[None, :, :] * enc, axis=-1).T + hb         # (TB, Tc)
        _store_chunk(out_ref, s, t, seq_len)
        _finalize_softmax(out_ref, fast)
    return kernel


def _make_concat_kernel(seq_len, fast):
    mx = jnp.bfloat16 if fast else jnp.float32
    def kernel(hid_ref, enc_ref, wht_ref, wet_ref, b_ref, v_ref, out_ref):
        t = pl.program_id(1)
        Tc, TB, H = enc_ref.shape
        hid = hid_ref[0]                                          # (TB, H)
        hp = jnp.dot(hid.astype(mx), wht_ref[...].astype(mx),
                     preferred_element_type=jnp.float32)
        hp = hp + b_ref[...].astype(jnp.float32)                  # (TB, H)
        # Only one seq chunk of encw/energy is ever live (no full-T intermediates).
        enc2d = enc_ref[...].reshape(Tc * TB, H)
        encw = jnp.dot(enc2d.astype(mx), wet_ref[...].astype(mx),
                       preferred_element_type=jnp.float32)        # (Tc*TB, H) MXU
        energy = jnp.tanh(encw.reshape(Tc, TB, H) + hp[None, :, :])
        s = jnp.sum(v_ref[...].astype(jnp.float32) * energy, axis=-1).T   # (TB, Tc)
        _store_chunk(out_ref, s, t, seq_len)
        _finalize_softmax(out_ref, fast)
    return kernel


# -----------------------------------------------------------------------------
# Wrapper
# -----------------------------------------------------------------------------

def attn_forward(method, hidden, encoder_outputs, params, fast=True):
    T, B, H = encoder_outputs.shape
    wdtype = jnp.bfloat16 if fast else jnp.float32

    if method == "dot":
        weights, weight_bytes, extra = [], 0, 1
    elif method == "general":
        W = params["W"].astype(wdtype)                  # (H, H); used as hid @ W
        b = params["b"].reshape(1, H).astype(jnp.float32)
        weights = [W, b]
        weight_bytes = W.size * W.dtype.itemsize + H * 4
        extra = 1
    elif method == "concat":
        W = params["W"]                                 # (H, 2H) concat Linear weight
        Wh_t = jnp.transpose(W[:, :H]).astype(wdtype)   # transposes hoisted to wrapper
        We_t = jnp.transpose(W[:, H:]).astype(wdtype)
        b = params["b"].reshape(1, H).astype(jnp.float32)
        v = params["v"].reshape(1, H).astype(jnp.float32)
        weights = [Wh_t, We_t, b, v]
        weight_bytes = (Wh_t.size + We_t.size) * Wh_t.dtype.itemsize + 2 * H * 4
        extra = 2                                       # encw + energy f32 chunk temps
    else:
        raise ValueError(method, "is not an appropriate attention method.")

    Bp0 = max(8, _round_up(B, 8))
    TB, Tc, T_pad = _choose_tiles(T, H, Bp0, weight_bytes, extra)
    Bp = _round_up(Bp0, TB)
    nT = T_pad // Tc

    # Pad batch (zero rows -> finite uniform softmax rows, sliced off afterwards).
    if Bp != B:
        encoder_outputs = jnp.pad(encoder_outputs, ((0, 0), (0, Bp - B), (0, 0)))
        hidden = jnp.pad(hidden, ((0, 0), (0, Bp - B), (0, 0)))
    # Keep every encoder chunk block overlapping the array: pad very short
    # sequences up to one chunk (longer sequences rely on standard partial edge
    # blocks; out-of-range positions are masked to -inf in-kernel either way).
    if Tc < 128:
        t_target = T_pad
    elif T < Tc:
        t_target = Tc
    else:
        t_target = T
    if t_target > T:
        encoder_outputs = jnp.pad(encoder_outputs,
                                  ((0, t_target - T), (0, 0), (0, 0)))

    grid = (Bp // TB, nT)                               # seq axis innermost

    hid_spec = pl.BlockSpec((1, TB, H), lambda bi, ti: (0, bi, 0))
    enc_spec = pl.BlockSpec((Tc, TB, H), lambda bi, ti: (ti, bi, 0))
    out_spec = pl.BlockSpec((nT, TB, Tc), lambda bi, ti: (0, bi, 0))  # resident over seq
    full = lambda arr: pl.BlockSpec(arr.shape, lambda bi, ti: (0,) * arr.ndim)
    out_shape = jax.ShapeDtypeStruct((nT, Bp, Tc), jnp.float32)
    cparams = pltpu.CompilerParams(
        dimension_semantics=("parallel", "arbitrary"),
        vmem_limit_bytes=_VMEM_LIMIT)

    if method == "dot":
        kernel = _make_dot_kernel(T, fast)
    elif method == "general":
        kernel = _make_general_kernel(T, fast)
    else:
        kernel = _make_concat_kernel(T, fast)

    out3 = pl.pallas_call(
        kernel,
        out_shape=out_shape,
        grid=grid,
        in_specs=[hid_spec, enc_spec] + [full(w) for w in weights],
        out_specs=out_spec,
        compiler_params=cparams,
    )(hidden, encoder_outputs, *weights)

    # (nT, Bp, Tc) -> (Bp, T_pad); small relayout on the tiny score tensor only.
    out = jnp.transpose(out3, (1, 0, 2)).reshape(Bp, nT * Tc)[:B, :T]
    return out[:, None, :]                               # (B, 1, T)


# -----------------------------------------------------------------------------
# Pure-JAX reference (matches the PyTorch module exactly)
# -----------------------------------------------------------------------------

def ref_attn(method, hidden, encoder_outputs, params):
    T, B, H = encoder_outputs.shape
    if method == "dot":
        energies = jnp.sum(hidden * encoder_outputs, axis=2)              # (T, B)
    elif method == "general":
        energy = encoder_outputs @ params["W"].T + params["b"]
        energies = jnp.sum(hidden * energy, axis=2)
    elif method == "concat":
        hid_exp = jnp.broadcast_to(hidden, (T, B, H))
        cat = jnp.concatenate([hid_exp, encoder_outputs], axis=2)
        energy = jnp.tanh(cat @ params["W"].T + params["b"])
        energies = jnp.sum(params["v"] * energy, axis=2)
    energies = energies.T                                                 # (B, T)
    return jax.nn.softmax(energies, axis=1)[:, None, :]                   # (B, 1, T)


# -----------------------------------------------------------------------------
# main
# -----------------------------------------------------------------------------

if __name__ == "__main__":
    key = jax.random.PRNGKey(0)
    T, B, H = 8, 4, 32                       # seq=8, batch=4, hidden=32
    k1, k2, k3, k4, k5, k6, k7 = jax.random.split(key, 7)

    hidden = jax.random.normal(k1, (1, B, H), jnp.float32)
    encoder_outputs = jax.random.normal(k2, (T, B, H), jnp.float32)

    params_general = {
        "W": jax.random.normal(k3, (H, H), jnp.float32) * 0.1,
        "b": jax.random.normal(k4, (H,), jnp.float32) * 0.1,
    }
    params_concat = {
        "W": jax.random.normal(k5, (H, 2 * H), jnp.float32) * 0.1,
        "b": jax.random.normal(k6, (H,), jnp.float32) * 0.1,
        "v": jax.random.normal(k7, (H,), jnp.float32),
    }

    ok = True
    for method, params in [("dot", {}),
                           ("general", params_general),
                           ("concat", params_concat)]:
        ref = ref_attn(method, hidden, encoder_outputs, params)
        # fast=False: full f32 / exact reciprocal (tight check).
        # fast=True : bf16 MXU operands + EUP approx reciprocal (perf mode).
        for fast, atol in [(False, 2e-5), (True, 3e-2)]:
            out = jax.block_until_ready(
                attn_forward(method, hidden, encoder_outputs, params, fast=fast))
            if out.shape != (B, 1, T):
                ok = False
                print(f"{method} fast={fast}: bad shape {out.shape}")
                continue
            err = float(jnp.max(jnp.abs(out - ref)))
            if err > atol:
                ok = False
                print(f"{method} fast={fast}: max abs diff {err}")

    if ok:
        print("KERNEL_OK")
</pallas_src>

<mosaic_0001>
module attributes {stable_mosaic.version = 11 : i64} {
  func.func @kernel(%arg0: i32, %arg1: i32, %arg2: memref<1x8x32xf32, #tpu.memory_space<vmem>>, %arg3: memref<128x8x32xf32, #tpu.memory_space<vmem>>, %arg4: memref<1x8x128xf32, #tpu.memory_space<vmem>>) attributes {dimension_semantics = [#tpu.dimension_semantics<parallel>, #tpu.dimension_semantics<arbitrary>], iteration_bounds = array<i64: 1, 1>, scalar_prefetch = 0 : i64, scratch_operands = 0 : i64, tpu.core_type = #tpu.core_type<tc>, window_params = [{transform_indices = @transform_0, window_bounds = array<i64: 1, 8, 32>}, {transform_indices = @transform_1, window_bounds = array<i64: 128, 8, 32>}, {transform_indices = @transform_2, window_bounds = array<i64: 1, 8, 128>}]} {
    %c0 = arith.constant 0 : index
    %c0_0 = arith.constant 0 : index
    %c0_1 = arith.constant 0 : index
    %0 = vector.load %arg2[%c0, %c0_0, %c0_1] : memref<1x8x32xf32, #tpu.memory_space<vmem>>, vector<1x8x32xf32>
    %1 = vector.shape_cast %0 : vector<1x8x32xf32> to vector<8x32xf32>
    %c0_2 = arith.constant 0 : index
    %c0_3 = arith.constant 0 : index
    %c0_4 = arith.constant 0 : index
    %2 = vector.load %arg3[%c0_2, %c0_3, %c0_4] : memref<128x8x32xf32, #tpu.memory_space<vmem>>, vector<128x8x32xf32>
    %3 = vector.shape_cast %1 : vector<8x32xf32> to vector<1x8x32xf32>
    %4 = vector.broadcast %3 : vector<1x8x32xf32> to vector<128x8x32xf32>
    %5 = arith.mulf %4, %2 : vector<128x8x32xf32>
    %cst = arith.constant dense<0.000000e+00> : vector<128x8xf32>
    %6 = vector.multi_reduction <add>, %5, %cst [2] : vector<128x8x32xf32> to vector<128x8xf32>
    %7 = tpu.transpose %6, [1, 0] : vector<128x8xf32> -> vector<8x128xf32>
    %c128_i32 = arith.constant 128 : i32
    %8 = arith.muli %arg1, %c128_i32 : i32
    %9 = tpu.iota {dimensions = array<i32: 1>} : vector<8x128xi32>
    %10 = vector.broadcast %8 : i32 to vector<8x128xi32>
    %11 = arith.addi %10, %9 : vector<8x128xi32>
    %c8_i32 = arith.constant 8 : i32
    %12 = vector.broadcast %c8_i32 : i32 to vector<8x128xi32>
    %13 = arith.cmpi slt, %11, %12 : vector<8x128xi32>
    %cst_5 = arith.constant 0xFF800000 : f32
    %14 = vector.broadcast %cst_5 : f32 to vector<8x128xf32>
    %15 = arith.select %13, %7, %14 : vector<8x128xi1>, vector<8x128xf32>
    %16 = arith.index_cast %arg1 : i32 to index
    %c0_6 = arith.constant 0 : index
    %c0_7 = arith.constant 0 : index
    %17 = vector.load %arg4[%16, %c0_6, %c0_7] : memref<1x8x128xf32, #tpu.memory_space<vmem>>, vector<1x8x128xf32>
    %18 = vector.shape_cast %17 : vector<1x8x128xf32> to vector<8x128xf32>
    %19 = vector.shape_cast %15 : vector<8x128xf32> to vector<1x8x128xf32>
    tpu.vector_store %arg4[%16, %c0_6, %c0_7], %19 {strides = array<i32>} : memref<1x8x128xf32, #tpu.memory_space<vmem>>, vector<1x8x128xf32>,
    %c0_i32 = arith.constant 0 : i32
    %20 = arith.cmpi eq, %arg1, %c0_i32 : i32
    %21 = arith.extui %20 : i1 to i32
    %c0_i32_8 = arith.constant 0 : i32
    %22 = arith.cmpi ne, %21, %c0_i32_8 : i32
    scf.if %22 {
      %c0_9 = arith.constant 0 : index
      %c0_10 = arith.constant 0 : index
      %c0_11 = arith.constant 0 : index
      %23 = vector.load %arg4[%c0_9, %c0_10, %c0_11] : memref<1x8x128xf32, #tpu.memory_space<vmem>>, vector<1x8x128xf32>
      %cst_12 = arith.constant dense<0xFF800000> : vector<8xf32>
      %24 = vector.multi_reduction <maximumf>, %23, %cst_12 [0, 2] : vector<1x8x128xf32> to vector<8xf32>
      %25 = vector.shape_cast %24 : vector<8xf32> to vector<1x8x1xf32>
      %26 = vector.broadcast %25 : vector<1x8x1xf32> to vector<1x8x128xf32>
      %27 = arith.subf %23, %26 : vector<1x8x128xf32>
      %28 = math.exp %27 : vector<1x8x128xf32>
      %cst_13 = arith.constant dense<0.000000e+00> : vector<8xf32>
      %29 = vector.multi_reduction <add>, %28, %cst_13 [0, 2] : vector<1x8x128xf32> to vector<8xf32>
      %30 = vector.shape_cast %29 : vector<8xf32> to vector<1x8x1xf32>
      %31 = tpu.reciprocal %30 : vector<1x8x1xf32> -> vector<1x8x1xf32>
      %32 = vector.broadcast %31 : vector<1x8x1xf32> to vector<1x8x128xf32>
      %33 = arith.mulf %28, %32 : vector<1x8x128xf32>
      %c0_14 = arith.constant 0 : index
      %c0_15 = arith.constant 0 : index
      %c0_16 = arith.constant 0 : index
      %34 = vector.load %arg4[%c0_14, %c0_15, %c0_16] : memref<1x8x128xf32, #tpu.memory_space<vmem>>, vector<1x8x128xf32>
      tpu.vector_store %arg4[%c0_14, %c0_15, %c0_16], %33 {strides = array<i32>} : memref<1x8x128xf32, #tpu.memory_space<vmem>>, vector<1x8x128xf32>,
    } else {
    }
    return
  }
  func.func @transform_0(%arg0: i32, %arg1: i32) -> (i32, i32, i32) {
    %c0_i32 = arith.constant 0 : i32
    %c0_i32_0 = arith.constant 0 : i32
    %c0_i32_1 = arith.constant 0 : i32
    return %c0_i32, %arg0, %c0_i32_0 : i32, i32, i32
  }
  func.func @transform_1(%arg0: i32, %arg1: i32) -> (i32, i32, i32) {
    %c0_i32 = arith.constant 0 : i32
    %c0_i32_0 = arith.constant 0 : i32
    return %arg1, %arg0, %c0_i32 : i32, i32, i32
  }
  func.func @transform_2(%arg0: i32, %arg1: i32) -> (i32, i32, i32) {
    %c0_i32 = arith.constant 0 : i32
    %c0_i32_0 = arith.constant 0 : i32
    %c0_i32_1 = arith.constant 0 : i32
    return %c0_i32, %arg0, %c0_i32_0 : i32, i32, i32
  }
}

</mosaic_0001>

<llo_original>
// kernel: tpu_custom_call.1
$region0: #{tpu_custom_call.1}
  #allocation0 [shape = 'u32[]', space=smem, size = 0x4, offset = 0x4, fixed_abs, tag = 'smem constant byte address 0x4 - core index']
  #allocation1 [shape = 'u32[72,128]{1,0:T(1,128)}', space=vmem, size = 0x9000, scoped, tag = 'internal scratch']
  %s0 = inlined_call_operand.vmem [shape: f32[1,8,32], index: 0, kind: input, shape index: {}]
  %s1 = inlined_call_operand.vmem [shape: f32[128,8,32], index: 1, kind: input, shape index: {}]
  %s2 = inlined_call_operand.hbm [shape: f32[1,8,128], index: 2, kind: output, shape index: {}]
  %s3 = sld [smem:[#allocation0]]
  $region22: #{tpu_custom_call.1} parent=0
    _
  %s5 = ssub.s32 1, %s3
  %s6 = scalar_select 0, %s5, %s3
  $region1: #{tpu_custom_call.1} parent=0
    #allocation2 [shape = 'u8[4096]{0}', space=vmem, size = 0x1000, scoped, tag = 'output window, operand 0, single buffered']
    #allocation3 [shape = 's32[1]{0}', space=sflag, size = 0x4, scoped, tag = 'scoped memory for tpu_custom_call.1']
    %7 = vsyncpa [#allocation3], 0
    // Predicated region
    $region2: #{tpu_custom_call.1} parent=1 // pred_check
      _
    $region3: #{tpu_custom_call.1} parent=1 // pred_check_branch
      %9 = sbr.rel (0) target = $region5
    $region4: #{tpu_custom_call.1} parent=1 // pred_region
      _
    $region5: #{tpu_custom_call.1} parent=1 // pred_fallthru
      _
    // Predicated region
    $region6: #{tpu_custom_call.1} parent=1 // pred_check
      _
    $region7: #{tpu_custom_call.1} parent=1 // pred_check_branch
      %11 = sbr.rel (0) target = $region9
    $region8: #{tpu_custom_call.1} parent=1 // pred_region
      _
    $region9: #{tpu_custom_call.1} parent=1 // pred_fallthru
      _
    %v12 = vld [vmem:[%s0] sm:$0xff]
    %v13 = vld [vmem:[%s1] sm:$0xff]
    %v14 = vld [vmem:[%s1 + $0x8] sm:$0xff]
    %v15 = vld [vmem:[%s1 + $0x10] sm:$0xff]
    %v16 = vld [vmem:[%s1 + $0x18] sm:$0xff]
    %v17 = vld [vmem:[%s1 + $0x20] sm:$0xff]
    %v18 = vld [vmem:[%s1 + $0x28] sm:$0xff]
    %v19 = vld [vmem:[%s1 + $0x30] sm:$0xff]
    %v20 = vld [vmem:[%s1 + $0x38] sm:$0xff]
    %v21 = vld [vmem:[%s1 + $0x40] sm:$0xff]
    %v22 = vld [vmem:[%s1 + $0x48] sm:$0xff]
    %v23 = vld [vmem:[%s1 + $0x50] sm:$0xff]
    %v24 = vld [vmem:[%s1 + $0x58] sm:$0xff]
    %v25 = vld [vmem:[%s1 + $0x60] sm:$0xff]
    %v26 = vld [vmem:[%s1 + $0x68] sm:$0xff]
    %v27 = vld [vmem:[%s1 + $0x70] sm:$0xff]
    %v28 = vld [vmem:[%s1 + $0x78] sm:$0xff]
    %v29 = vld [vmem:[%s1 + $0x80] sm:$0xff]
    %v30 = vld [vmem:[%s1 + $0x88] sm:$0xff]
    %v31 = vld [vmem:[%s1 + $0x90] sm:$0xff]
    %v32 = vld [vmem:[%s1 + $0x98] sm:$0xff]
    %v33 = vld [vmem:[%s1 + $0xa0] sm:$0xff]
    %v34 = vld [vmem:[%s1 + $0xa8] sm:$0xff]
    %v35 = vld [vmem:[%s1 + $0xb0] sm:$0xff]
    %v36 = vld [vmem:[%s1 + $0xb8] sm:$0xff]
    %v37 = vld [vmem:[%s1 + $0xc0] sm:$0xff]
    %v38 = vld [vmem:[%s1 + $0xc8] sm:$0xff]
    %v39 = vld [vmem:[%s1 + $0xd0] sm:$0xff]
    %v40 = vld [vmem:[%s1 + $0xd8] sm:$0xff]
    %v41 = vld [vmem:[%s1 + $0xe0] sm:$0xff]
    %v42 = vld [vmem:[%s1 + $0xe8] sm:$0xff]
    %v43 = vld [vmem:[%s1 + $0xf0] sm:$0xff]
    %v44 = vld [vmem:[%s1 + $0xf8] sm:$0xff]
    %v45 = vld [vmem:[%s1 + $0x100] sm:$0xff]
    %v46 = vld [vmem:[%s1 + $0x108] sm:$0xff]
    %v47 = vld [vmem:[%s1 + $0x110] sm:$0xff]
    %v48 = vld [vmem:[%s1 + $0x118] sm:$0xff]
    %v49 = vld [vmem:[%s1 + $0x120] sm:$0xff]
    %v50 = vld [vmem:[%s1 + $0x128] sm:$0xff]
    %v51 = vld [vmem:[%s1 + $0x130] sm:$0xff]
    %v52 = vld [vmem:[%s1 + $0x138] sm:$0xff]
    %v53 = vld [vmem:[%s1 + $0x140] sm:$0xff]
    %v54 = vld [vmem:[%s1 + $0x148] sm:$0xff]
    %v55 = vld [vmem:[%s1 + $0x150] sm:$0xff]
    %v56 = vld [vmem:[%s1 + $0x158] sm:$0xff]
    %v57 = vld [vmem:[%s1 + $0x160] sm:$0xff]
    %v58 = vld [vmem:[%s1 + $0x168] sm:$0xff]
    %v59 = vld [vmem:[%s1 + $0x170] sm:$0xff]
    %v60 = vld [vmem:[%s1 + $0x178] sm:$0xff]
    %v61 = vld [vmem:[%s1 + $0x180] sm:$0xff]
    %v62 = vld [vmem:[%s1 + $0x188] sm:$0xff]
    %v63 = vld [vmem:[%s1 + $0x190] sm:$0xff]
    %v64 = vld [vmem:[%s1 + $0x198] sm:$0xff]
    %v65 = vld [vmem:[%s1 + $0x1a0] sm:$0xff]
    %v66 = vld [vmem:[%s1 + $0x1a8] sm:$0xff]
    %v67 = vld [vmem:[%s1 + $0x1b0] sm:$0xff]
    %v68 = vld [vmem:[%s1 + $0x1b8] sm:$0xff]
    %v69 = vld [vmem:[%s1 + $0x1c0] sm:$0xff]
    %v70 = vld [vmem:[%s1 + $0x1c8] sm:$0xff]
    %v71 = vld [vmem:[%s1 + $0x1d0] sm:$0xff]
    %v72 = vld [vmem:[%s1 + $0x1d8] sm:$0xff]
    %v73 = vld [vmem:[%s1 + $0x1e0] sm:$0xff]
    %v74 = vld [vmem:[%s1 + $0x1e8] sm:$0xff]
    %v75 = vld [vmem:[%s1 + $0x1f0] sm:$0xff]
    %v76 = vld [vmem:[%s1 + $0x1f8] sm:$0xff]
    %v77 = vld [vmem:[%s1 + $0x200] sm:$0xff]
    %v78 = vld [vmem:[%s1 + $0x208] sm:$0xff]
    %v79 = vld [vmem:[%s1 + $0x210] sm:$0xff]
    %v80 = vld [vmem:[%s1 + $0x218] sm:$0xff]
    %v81 = vld [vmem:[%s1 + $0x220] sm:$0xff]
    %v82 = vld [vmem:[%s1 + $0x228] sm:$0xff]
    %v83 = vld [vmem:[%s1 + $0x230] sm:$0xff]
    %v84 = vld [vmem:[%s1 + $0x238] sm:$0xff]
    %v85 = vld [vmem:[%s1 + $0x240] sm:$0xff]
    %v86 = vld [vmem:[%s1 + $0x248] sm:$0xff]
    %v87 = vld [vmem:[%s1 + $0x250] sm:$0xff]
    %v88 = vld [vmem:[%s1 + $0x258] sm:$0xff]
    %v89 = vld [vmem:[%s1 + $0x260] sm:$0xff]
    %v90 = vld [vmem:[%s1 + $0x268] sm:$0xff]
    %v91 = vld [vmem:[%s1 + $0x270] sm:$0xff]
    %v92 = vld [vmem:[%s1 + $0x278] sm:$0xff]
    %v93 = vld [vmem:[%s1 + $0x280] sm:$0xff]
    %v94 = vld [vmem:[%s1 + $0x288] sm:$0xff]
    %v95 = vld [vmem:[%s1 + $0x290] sm:$0xff]
    %v96 = vld [vmem:[%s1 + $0x298] sm:$0xff]
    %v97 = vld [vmem:[%s1 + $0x2a0] sm:$0xff]
    %v98 = vld [vmem:[%s1 + $0x2a8] sm:$0xff]
    %v99 = vld [vmem:[%s1 + $0x2b0] sm:$0xff]
    %v100 = vld [vmem:[%s1 + $0x2b8] sm:$0xff]
    %v101 = vld [vmem:[%s1 + $0x2c0] sm:$0xff]
    %v102 = vld [vmem:[%s1 + $0x2c8] sm:$0xff]
    %v103 = vld [vmem:[%s1 + $0x2d0] sm:$0xff]
    %v104 = vld [vmem:[%s1 + $0x2d8] sm:$0xff]
    %v105 = vld [vmem:[%s1 + $0x2e0] sm:$0xff]
    %v106 = vld [vmem:[%s1 + $0x2e8] sm:$0xff]
    %v107 = vld [vmem:[%s1 + $0x2f0] sm:$0xff]
    %v108 = vld [vmem:[%s1 + $0x2f8] sm:$0xff]
    %v109 = vld [vmem:[%s1 + $0x300] sm:$0xff]
    %v110 = vld [vmem:[%s1 + $0x308] sm:$0xff]
    %v111 = vld [vmem:[%s1 + $0x310] sm:$0xff]
    %v112 = vld [vmem:[%s1 + $0x318] sm:$0xff]
    %v113 = vld [vmem:[%s1 + $0x320] sm:$0xff]
    %v114 = vld [vmem:[%s1 + $0x328] sm:$0xff]
    %v115 = vld [vmem:[%s1 + $0x330] sm:$0xff]
    %v116 = vld [vmem:[%s1 + $0x338] sm:$0xff]
    %v117 = vld [vmem:[%s1 + $0x340] sm:$0xff]
    %v118 = vld [vmem:[%s1 + $0x348] sm:$0xff]
    %v119 = vld [vmem:[%s1 + $0x350] sm:$0xff]
    %v120 = vld [vmem:[%s1 + $0x358] sm:$0xff]
    %v121 = vld [vmem:[%s1 + $0x360] sm:$0xff]
    %v122 = vld [vmem:[%s1 + $0x368] sm:$0xff]
    %v123 = vld [vmem:[%s1 + $0x370] sm:$0xff]
    %v124 = vld [vmem:[%s1 + $0x378] sm:$0xff]
    %v125 = vld [vmem:[%s1 + $0x380] sm:$0xff]
    %v126 = vld [vmem:[%s1 + $0x388] sm:$0xff]
    %v127 = vld [vmem:[%s1 + $0x390] sm:$0xff]
    %v128 = vld [vmem:[%s1 + $0x398] sm:$0xff]
    %v129 = vld [vmem:[%s1 + $0x3a0] sm:$0xff]
    %v130 = vld [vmem:[%s1 + $0x3a8] sm:$0xff]
    %v131 = vld [vmem:[%s1 + $0x3b0] sm:$0xff]
    %v132 = vld [vmem:[%s1 + $0x3b8] sm:$0xff]
    %v133 = vld [vmem:[%s1 + $0x3c0] sm:$0xff]
    %v134 = vld [vmem:[%s1 + $0x3c8] sm:$0xff]
    %v135 = vld [vmem:[%s1 + $0x3d0] sm:$0xff]
    %v136 = vld [vmem:[%s1 + $0x3d8] sm:$0xff]
    %v137 = vld [vmem:[%s1 + $0x3e0] sm:$0xff]
    %v138 = vld [vmem:[%s1 + $0x3e8] sm:$0xff]
    %v139 = vld [vmem:[%s1 + $0x3f0] sm:$0xff]
    %v140 = vld [vmem:[%s1 + $0x3f8] sm:$0xff]
    %v141 = vmul.f32 %v12, %v13
    %v142 = vmul.f32 %v12, %v14
    %v143 = vmul.f32 %v12, %v15
    %v144 = vmul.f32 %v12, %v16
    %v145 = vmul.f32 %v12, %v17
    %v146 = vmul.f32 %v12, %v18
    %v147 = vmul.f32 %v12, %v19
    %v148 = vmul.f32 %v12, %v20
    %v149 = vmul.f32 %v12, %v21
    %v150 = vmul.f32 %v12, %v22
    %v151 = vmul.f32 %v12, %v23
    %v152 = vmul.f32 %v12, %v24
    %v153 = vmul.f32 %v12, %v25
    %v154 = vmul.f32 %v12, %v26
    %v155 = vmul.f32 %v12, %v27
    %v156 = vmul.f32 %v12, %v28
    %v157 = vmul.f32 %v12, %v29
    %v158 = vmul.f32 %v12, %v30
    %v159 = vmul.f32 %v12, %v31
    %v160 = vmul.f32 %v12, %v32
    %v161 = vmul.f32 %v12, %v33
    %v162 = vmul.f32 %v12, %v34
    %v163 = vmul.f32 %v12, %v35
    %v164 = vmul.f32 %v12, %v36
    %v165 = vmul.f32 %v12, %v37
    %v166 = vmul.f32 %v12, %v38
    %v167 = vmul.f32 %v12, %v39
    %v168 = vmul.f32 %v12, %v40
    %v169 = vmul.f32 %v12, %v41
    %v170 = vmul.f32 %v12, %v42
    %v171 = vmul.f32 %v12, %v43
    %v172 = vmul.f32 %v12, %v44
    %v173 = vmul.f32 %v12, %v45
    %v174 = vmul.f32 %v12, %v46
    %v175 = vmul.f32 %v12, %v47
    %v176 = vmul.f32 %v12, %v48
    %v177 = vmul.f32 %v12, %v49
    %v178 = vmul.f32 %v12, %v50
    %v179 = vmul.f32 %v12, %v51
    %v180 = vmul.f32 %v12, %v52
    %v181 = vmul.f32 %v12, %v53
    %v182 = vmul.f32 %v12, %v54
    %v183 = vmul.f32 %v12, %v55
    %v184 = vmul.f32 %v12, %v56
    %v185 = vmul.f32 %v12, %v57
    %v186 = vmul.f32 %v12, %v58
    %v187 = vmul.f32 %v12, %v59
    %v188 = vmul.f32 %v12, %v60
    %v189 = vmul.f32 %v12, %v61
    %v190 = vmul.f32 %v12, %v62
    %v191 = vmul.f32 %v12, %v63
    %v192 = vmul.f32 %v12, %v64
    %v193 = vmul.f32 %v12, %v65
    %v194 = vmul.f32 %v12, %v66
    %v195 = vmul.f32 %v12, %v67
    %v196 = vmul.f32 %v12, %v68
    %v197 = vmul.f32 %v12, %v69
    %v198 = vmul.f32 %v12, %v70
    %v199 = vmul.f32 %v12, %v71
    %v200 = vmul.f32 %v12, %v72
    %v201 = vmul.f32 %v12, %v73
    %v202 = vmul.f32 %v12, %v74
    %v203 = vmul.f32 %v12, %v75
    %v204 = vmul.f32 %v12, %v76
    %v205 = vmul.f32 %v12, %v77
    %v206 = vmul.f32 %v12, %v78
    %v207 = vmul.f32 %v12, %v79
    %v208 = vmul.f32 %v12, %v80
    %v209 = vmul.f32 %v12, %v81
    %v210 = vmul.f32 %v12, %v82
    %v211 = vmul.f32 %v12, %v83
    %v212 = vmul.f32 %v12, %v84
    %v213 = vmul.f32 %v12, %v85
    %v214 = vmul.f32 %v12, %v86
    %v215 = vmul.f32 %v12, %v87
    %v216 = vmul.f32 %v12, %v88
    %v217 = vmul.f32 %v12, %v89
    %v218 = vmul.f32 %v12, %v90
    %v219 = vmul.f32 %v12, %v91
    %v220 = vmul.f32 %v12, %v92
    %v221 = vmul.f32 %v12, %v93
    %v222 = vmul.f32 %v12, %v94
    %v223 = vmul.f32 %v12, %v95
    %v224 = vmul.f32 %v12, %v96
    %v225 = vmul.f32 %v12, %v97
    %v226 = vmul.f32 %v12, %v98
    %v227 = vmul.f32 %v12, %v99
    %v228 = vmul.f32 %v12, %v100
    %v229 = vmul.f32 %v12, %v101
    %v230 = vmul.f32 %v12, %v102
    %v231 = vmul.f32 %v12, %v103
    %v232 = vmul.f32 %v12, %v104
    %v233 = vmul.f32 %v12, %v105
    %v234 = vmul.f32 %v12, %v106
    %v235 = vmul.f32 %v12, %v107
    %v236 = vmul.f32 %v12, %v108
    %v237 = vmul.f32 %v12, %v109
    %v238 = vmul.f32 %v12, %v110
    %v239 = vmul.f32 %v12, %v111
    %v240 = vmul.f32 %v12, %v112
    %v241 = vmul.f32 %v12, %v113
    %v242 = vmul.f32 %v12, %v114
    %v243 = vmul.f32 %v12, %v115
    %v244 = vmul.f32 %v12, %v116
    %v245 = vmul.f32 %v12, %v117
    %v246 = vmul.f32 %v12, %v118
    %v247 = vmul.f32 %v12, %v119
    %v248 = vmul.f32 %v12, %v120
    %v249 = vmul.f32 %v12, %v121
    %v250 = vmul.f32 %v12, %v122
    %v251 = vmul.f32 %v12, %v123
    %v252 = vmul.f32 %v12, %v124
    %v253 = vmul.f32 %v12, %v125
    %v254 = vmul.f32 %v12, %v126
    %v255 = vmul.f32 %v12, %v127
    %v256 = vmul.f32 %v12, %v128
    %v257 = vmul.f32 %v12, %v129
    %v258 = vmul.f32 %v12, %v130
    %v259 = vmul.f32 %v12, %v131
    %v260 = vmul.f32 %v12, %v132
    %v261 = vmul.f32 %v12, %v133
    %v262 = vmul.f32 %v12, %v134
    %v263 = vmul.f32 %v12, %v135
    %v264 = vmul.f32 %v12, %v136
    %v265 = vmul.f32 %v12, %v137
    %v266 = vmul.f32 %v12, %v138
    %v267 = vmul.f32 %v12, %v139
    %v268 = vmul.f32 %v12, %v140
    %vm269 = vcmask 261120
    %v270 = vsel %vm269, %v141, 0.0
    %271 = vadd.xlane.f32.xlu0 %v270
    %v272 = vpop.xlane.xlu0 %271
    %v273 = vsel %vm269, %v142, 0.0
    %274 = vadd.xlane.f32.xlu0 %v273
    %v275 = vpop.xlane.xlu0 %274
    %v276 = vsel %vm269, %v143, 0.0
    %277 = vadd.xlane.f32.xlu0 %v276
    %v278 = vpop.xlane.xlu0 %277
    %v279 = vsel %vm269, %v144, 0.0
    %280 = vadd.xlane.f32.xlu0 %v279
    %v281 = vpop.xlane.xlu0 %280
    %v282 = vsel %vm269, %v145, 0.0
    %283 = vadd.xlane.f32.xlu0 %v282
    %v284 = vpop.xlane.xlu0 %283
    %v285 = vsel %vm269, %v146, 0.0
    %286 = vadd.xlane.f32.xlu0 %v285
    %v287 = vpop.xlane.xlu0 %286
    %v288 = vsel %vm269, %v147, 0.0
    %289 = vadd.xlane.f32.xlu0 %v288
    %v290 = vpop.xlane.xlu0 %289
    %v291 = vsel %vm269, %v148, 0.0
    %292 = vadd.xlane.f32.xlu0 %v291
    %v293 = vpop.xlane.xlu0 %292
    %v294 = vsel %vm269, %v149, 0.0
    %295 = vadd.xlane.f32.xlu0 %v294
    %v296 = vpop.xlane.xlu0 %295
    %v297 = vsel %vm269, %v150, 0.0
    %298 = vadd.xlane.f32.xlu0 %v297
    %v299 = vpop.xlane.xlu0 %298
    %v300 = vsel %vm269, %v151, 0.0
    %301 = vadd.xlane.f32.xlu0 %v300
    %v302 = vpop.xlane.xlu0 %301
    %v303 = vsel %vm269, %v152, 0.0
    %304 = vadd.xlane.f32.xlu0 %v303
    %v305 = vpop.xlane.xlu0 %304
    %v306 = vsel %vm269, %v153, 0.0
    %307 = vadd.xlane.f32.xlu0 %v306
    %v308 = vpop.xlane.xlu0 %307
    %v309 = vsel %vm269, %v154, 0.0
    %310 = vadd.xlane.f32.xlu0 %v309
    %v311 = vpop.xlane.xlu0 %310
    %v312 = vsel %vm269, %v155, 0.0
    %313 = vadd.xlane.f32.xlu0 %v312
    %v314 = vpop.xlane.xlu0 %313
    %v315 = vsel %vm269, %v156, 0.0
    %316 = vadd.xlane.f32.xlu0 %v315
    %v317 = vpop.xlane.xlu0 %316
    %v318 = vsel %vm269, %v157, 0.0
    %319 = vadd.xlane.f32.xlu0 %v318
    %v320 = vpop.xlane.xlu0 %319
    %v321 = vsel %vm269, %v158, 0.0
    %322 = vadd.xlane.f32.xlu0 %v321
    %v323 = vpop.xlane.xlu0 %322
    %v324 = vsel %vm269, %v159, 0.0
    %325 = vadd.xlane.f32.xlu0 %v324
    %v326 = vpop.xlane.xlu0 %325
    %v327 = vsel %vm269, %v160, 0.0
    %328 = vadd.xlane.f32.xlu0 %v327
    %v329 = vpop.xlane.xlu0 %328
    %v330 = vsel %vm269, %v161, 0.0
    %331 = vadd.xlane.f32.xlu0 %v330
    %v332 = vpop.xlane.xlu0 %331
    %v333 = vsel %vm269, %v162, 0.0
    %334 = vadd.xlane.f32.xlu0 %v333
    %v335 = vpop.xlane.xlu0 %334
    %v336 = vsel %vm269, %v163, 0.0
    %337 = vadd.xlane.f32.xlu0 %v336
    %v338 = vpop.xlane.xlu0 %337
    %v339 = vsel %vm269, %v164, 0.0
    %340 = vadd.xlane.f32.xlu0 %v339
    %v341 = vpop.xlane.xlu0 %340
    %v342 = vsel %vm269, %v165, 0.0
    %343 = vadd.xlane.f32.xlu0 %v342
    %v344 = vpop.xlane.xlu0 %343
    %v345 = vsel %vm269, %v166, 0.0
    %346 = vadd.xlane.f32.xlu0 %v345
    %v347 = vpop.xlane.xlu0 %346
    %v348 = vsel %vm269, %v167, 0.0
    %349 = vadd.xlane.f32.xlu0 %v348
    %v350 = vpop.xlane.xlu0 %349
    %v351 = vsel %vm269, %v168, 0.0
    %352 = vadd.xlane.f32.xlu0 %v351
    %v353 = vpop.xlane.xlu0 %352
    %v354 = vsel %vm269, %v169, 0.0
    %355 = vadd.xlane.f32.xlu0 %v354
    %v356 = vpop.xlane.xlu0 %355
    %v357 = vsel %vm269, %v170, 0.0
    %358 = vadd.xlane.f32.xlu0 %v357
    %v359 = vpop.xlane.xlu0 %358
    %v360 = vsel %vm269, %v171, 0.0
    %361 = vadd.xlane.f32.xlu0 %v360
    %v362 = vpop.xlane.xlu0 %361
    %v363 = vsel %vm269, %v172, 0.0
    %364 = vadd.xlane.f32.xlu0 %v363
    %v365 = vpop.xlane.xlu0 %364
    %v366 = vsel %vm269, %v173, 0.0
    %367 = vadd.xlane.f32.xlu0 %v366
    %v368 = vpop.xlane.xlu0 %367
    %v369 = vsel %vm269, %v174, 0.0
    %370 = vadd.xlane.f32.xlu0 %v369
    %v371 = vpop.xlane.xlu0 %370
    %v372 = vsel %vm269, %v175, 0.0
    %373 = vadd.xlane.f32.xlu0 %v372
    %v374 = vpop.xlane.xlu0 %373
    %v375 = vsel %vm269, %v176, 0.0
    %376 = vadd.xlane.f32.xlu0 %v375
    %v377 = vpop.xlane.xlu0 %376
    %v378 = vsel %vm269, %v177, 0.0
    %379 = vadd.xlane.f32.xlu0 %v378
    %v380 = vpop.xlane.xlu0 %379
    %v381 = vsel %vm269, %v178, 0.0
    %382 = vadd.xlane.f32.xlu0 %v381
    %v383 = vpop.xlane.xlu0 %382
    %v384 = vsel %vm269, %v179, 0.0
    %385 = vadd.xlane.f32.xlu0 %v384
    %v386 = vpop.xlane.xlu0 %385
    %v387 = vsel %vm269, %v180, 0.0
    %388 = vadd.xlane.f32.xlu0 %v387
    %v389 = vpop.xlane.xlu0 %388
    %v390 = vsel %vm269, %v181, 0.0
    %391 = vadd.xlane.f32.xlu0 %v390
    %v392 = vpop.xlane.xlu0 %391
    %v393 = vsel %vm269, %v182, 0.0
    %394 = vadd.xlane.f32.xlu0 %v393
    %v395 = vpop.xlane.xlu0 %394
    %v396 = vsel %vm269, %v183, 0.0
    %397 = vadd.xlane.f32.xlu0 %v396
    %v398 = vpop.xlane.xlu0 %397
    %v399 = vsel %vm269, %v184, 0.0
    %400 = vadd.xlane.f32.xlu0 %v399
    %v401 = vpop.xlane.xlu0 %400
    %v402 = vsel %vm269, %v185, 0.0
    %403 = vadd.xlane.f32.xlu0 %v402
    %v404 = vpop.xlane.xlu0 %403
    %v405 = vsel %vm269, %v186, 0.0
    %406 = vadd.xlane.f32.xlu0 %v405
    %v407 = vpop.xlane.xlu0 %406
    %v408 = vsel %vm269, %v187, 0.0
    %409 = vadd.xlane.f32.xlu0 %v408
    %v410 = vpop.xlane.xlu0 %409
    %v411 = vsel %vm269, %v188, 0.0
    %412 = vadd.xlane.f32.xlu0 %v411
    %v413 = vpop.xlane.xlu0 %412
    %v414 = vsel %vm269, %v189, 0.0
    %415 = vadd.xlane.f32.xlu0 %v414
    %v416 = vpop.xlane.xlu0 %415
    %v417 = vsel %vm269, %v190, 0.0
    %418 = vadd.xlane.f32.xlu0 %v417
    %v419 = vpop.xlane.xlu0 %418
    %v420 = vsel %vm269, %v191, 0.0
    %421 = vadd.xlane.f32.xlu0 %v420
    %v422 = vpop.xlane.xlu0 %421
    %v423 = vsel %vm269, %v192, 0.0
    %424 = vadd.xlane.f32.xlu0 %v423
    %v425 = vpop.xlane.xlu0 %424
    %v426 = vsel %vm269, %v193, 0.0
    %427 = vadd.xlane.f32.xlu0 %v426
    %v428 = vpop.xlane.xlu0 %427
    %v429 = vsel %vm269, %v194, 0.0
    %430 = vadd.xlane.f32.xlu0 %v429
    %v431 = vpop.xlane.xlu0 %430
    %v432 = vsel %vm269, %v195, 0.0
    %433 = vadd.xlane.f32.xlu0 %v432
    %v434 = vpop.xlane.xlu0 %433
    %v435 = vsel %vm269, %v196, 0.0
    %436 = vadd.xlane.f32.xlu0 %v435
    %v437 = vpop.xlane.xlu0 %436
    %v438 = vsel %vm269, %v197, 0.0
    %439 = vadd.xlane.f32.xlu0 %v438
    %v440 = vpop.xlane.xlu0 %439
    %v441 = vsel %vm269, %v198, 0.0
    %442 = vadd.xlane.f32.xlu0 %v441
    %v443 = vpop.xlane.xlu0 %442
    %v444 = vsel %vm269, %v199, 0.0
    %445 = vadd.xlane.f32.xlu0 %v444
    %v446 = vpop.xlane.xlu0 %445
    %v447 = vsel %vm269, %v200, 0.0
    %448 = vadd.xlane.f32.xlu0 %v447
    %v449 = vpop.xlane.xlu0 %448
    %v450 = vsel %vm269, %v201, 0.0
    %451 = vadd.xlane.f32.xlu0 %v450
    %v452 = vpop.xlane.xlu0 %451
    %v453 = vsel %vm269, %v202, 0.0
    %454 = vadd.xlane.f32.xlu0 %v453
    %v455 = vpop.xlane.xlu0 %454
    %v456 = vsel %vm269, %v203, 0.0
    %457 = vadd.xlane.f32.xlu0 %v456
    %v458 = vpop.xlane.xlu0 %457
    %v459 = vsel %vm269, %v204, 0.0
    %460 = vadd.xlane.f32.xlu0 %v459
    %v461 = vpop.xlane.xlu0 %460
    %v462 = vsel %vm269, %v205, 0.0
    %463 = vadd.xlane.f32.xlu0 %v462
    %v464 = vpop.xlane.xlu0 %463
    %v465 = vsel %vm269, %v206, 0.0
    %466 = vadd.xlane.f32.xlu0 %v465
    %v467 = vpop.xlane.xlu0 %466
    %v468 = vsel %vm269, %v207, 0.0
    %469 = vadd.xlane.f32.xlu0 %v468
    %v470 = vpop.xlane.xlu0 %469
    %v471 = vsel %vm269, %v208, 0.0
    %472 = vadd.xlane.f32.xlu0 %v471
    %v473 = vpop.xlane.xlu0 %472
    %v474 = vsel %vm269, %v209, 0.0
    %475 = vadd.xlane.f32.xlu0 %v474
    %v476 = vpop.xlane.xlu0 %475
    %v477 = vsel %vm269, %v210, 0.0
    %478 = vadd.xlane.f32.xlu0 %v477
    %v479 = vpop.xlane.xlu0 %478
    %v480 = vsel %vm269, %v211, 0.0
    %481 = vadd.xlane.f32.xlu0 %v480
    %v482 = vpop.xlane.xlu0 %481
    %v483 = vsel %vm269, %v212, 0.0
    %484 = vadd.xlane.f32.xlu0 %v483
    %v485 = vpop.xlane.xlu0 %484
    %v486 = vsel %vm269, %v213, 0.0
    %487 = vadd.xlane.f32.xlu0 %v486
    %v488 = vpop.xlane.xlu0 %487
    %v489 = vsel %vm269, %v214, 0.0
    %490 = vadd.xlane.f32.xlu0 %v489
    %v491 = vpop.xlane.xlu0 %490
    %v492 = vsel %vm269, %v215, 0.0
    %493 = vadd.xlane.f32.xlu0 %v492
    %v494 = vpop.xlane.xlu0 %493
    %v495 = vsel %vm269, %v216, 0.0
    %496 = vadd.xlane.f32.xlu0 %v495
    %v497 = vpop.xlane.xlu0 %496
    %v498 = vsel %vm269, %v217, 0.0
    %499 = vadd.xlane.f32.xlu0 %v498
    %v500 = vpop.xlane.xlu0 %499
    %v501 = vsel %vm269, %v218, 0.0
    %502 = vadd.xlane.f32.xlu0 %v501
    %v503 = vpop.xlane.xlu0 %502
    %v504 = vsel %vm269, %v219, 0.0
    %505 = vadd.xlane.f32.xlu0 %v504
    %v506 = vpop.xlane.xlu0 %505
    %v507 = vsel %vm269, %v220, 0.0
    %508 = vadd.xlane.f32.xlu0 %v507
    %v509 = vpop.xlane.xlu0 %508
    %v510 = vsel %vm269, %v221, 0.0
    %511 = vadd.xlane.f32.xlu0 %v510
    %v512 = vpop.xlane.xlu0 %511
    %v513 = vsel %vm269, %v222, 0.0
    %514 = vadd.xlane.f32.xlu0 %v513
    %v515 = vpop.xlane.xlu0 %514
    %v516 = vsel %vm269, %v223, 0.0
    %517 = vadd.xlane.f32.xlu0 %v516
    %v518 = vpop.xlane.xlu0 %517
    %v519 = vsel %vm269, %v224, 0.0
    %520 = vadd.xlane.f32.xlu0 %v519
    %v521 = vpop.xlane.xlu0 %520
    %v522 = vsel %vm269, %v225, 0.0
    %523 = vadd.xlane.f32.xlu0 %v522
    %v524 = vpop.xlane.xlu0 %523
    %v525 = vsel %vm269, %v226, 0.0
    %526 = vadd.xlane.f32.xlu0 %v525
    %v527 = vpop.xlane.xlu0 %526
    %v528 = vsel %vm269, %v227, 0.0
    %529 = vadd.xlane.f32.xlu0 %v528
    %v530 = vpop.xlane.xlu0 %529
    %v531 = vsel %vm269, %v228, 0.0
    %532 = vadd.xlane.f32.xlu0 %v531
    %v533 = vpop.xlane.xlu0 %532
    %v534 = vsel %vm269, %v229, 0.0
    %535 = vadd.xlane.f32.xlu0 %v534
    %v536 = vpop.xlane.xlu0 %535
    %v537 = vsel %vm269, %v230, 0.0
    %538 = vadd.xlane.f32.xlu0 %v537
    %v539 = vpop.xlane.xlu0 %538
    %v540 = vsel %vm269, %v231, 0.0
    %541 = vadd.xlane.f32.xlu0 %v540
    %v542 = vpop.xlane.xlu0 %541
    %v543 = vsel %vm269, %v232, 0.0
    %544 = vadd.xlane.f32.xlu0 %v543
    %v545 = vpop.xlane.xlu0 %544
    %v546 = vsel %vm269, %v233, 0.0
    %547 = vadd.xlane.f32.xlu0 %v546
    %v548 = vpop.xlane.xlu0 %547
    %v549 = vsel %vm269, %v234, 0.0
    %550 = vadd.xlane.f32.xlu0 %v549
    %v551 = vpop.xlane.xlu0 %550
    %v552 = vsel %vm269, %v235, 0.0
    %553 = vadd.xlane.f32.xlu0 %v552
    %v554 = vpop.xlane.xlu0 %553
    %v555 = vsel %vm269, %v236, 0.0
    %556 = vadd.xlane.f32.xlu0 %v555
    %v557 = vpop.xlane.xlu0 %556
    %v558 = vsel %vm269, %v237, 0.0
    %559 = vadd.xlane.f32.xlu0 %v558
    %v560 = vpop.xlane.xlu0 %559
    %v561 = vsel %vm269, %v238, 0.0
    %562 = vadd.xlane.f32.xlu0 %v561
    %v563 = vpop.xlane.xlu0 %562
    %v564 = vsel %vm269, %v239, 0.0
    %565 = vadd.xlane.f32.xlu0 %v564
    %v566 = vpop.xlane.xlu0 %565
    %v567 = vsel %vm269, %v240, 0.0
    %568 = vadd.xlane.f32.xlu0 %v567
    %v569 = vpop.xlane.xlu0 %568
    %v570 = vsel %vm269, %v241, 0.0
    %571 = vadd.xlane.f32.xlu0 %v570
    %v572 = vpop.xlane.xlu0 %571
    %v573 = vsel %vm269, %v242, 0.0
    %574 = vadd.xlane.f32.xlu0 %v573
    %v575 = vpop.xlane.xlu0 %574
    %v576 = vsel %vm269, %v243, 0.0
    %577 = vadd.xlane.f32.xlu0 %v576
    %v578 = vpop.xlane.xlu0 %577
    %v579 = vsel %vm269, %v244, 0.0
    %580 = vadd.xlane.f32.xlu0 %v579
    %v581 = vpop.xlane.xlu0 %580
    %v582 = vsel %vm269, %v245, 0.0
    %583 = vadd.xlane.f32.xlu0 %v582
    %v584 = vpop.xlane.xlu0 %583
    %v585 = vsel %vm269, %v246, 0.0
    %586 = vadd.xlane.f32.xlu0 %v585
    %v587 = vpop.xlane.xlu0 %586
    %v588 = vsel %vm269, %v247, 0.0
    %589 = vadd.xlane.f32.xlu0 %v588
    %v590 = vpop.xlane.xlu0 %589
    %v591 = vsel %vm269, %v248, 0.0
    %592 = vadd.xlane.f32.xlu0 %v591
    %v593 = vpop.xlane.xlu0 %592
    %v594 = vsel %vm269, %v249, 0.0
    %595 = vadd.xlane.f32.xlu0 %v594
    %v596 = vpop.xlane.xlu0 %595
    %v597 = vsel %vm269, %v250, 0.0
    %598 = vadd.xlane.f32.xlu0 %v597
    %v599 = vpop.xlane.xlu0 %598
    %v600 = vsel %vm269, %v251, 0.0
    %601 = vadd.xlane.f32.xlu0 %v600
    %v602 = vpop.xlane.xlu0 %601
    %v603 = vsel %vm269, %v252, 0.0
    %604 = vadd.xlane.f32.xlu0 %v603
    %v605 = vpop.xlane.xlu0 %604
    %v606 = vsel %vm269, %v253, 0.0
    %607 = vadd.xlane.f32.xlu0 %v606
    %v608 = vpop.xlane.xlu0 %607
    %v609 = vsel %vm269, %v254, 0.0
    %610 = vadd.xlane.f32.xlu0 %v609
    %v611 = vpop.xlane.xlu0 %610
    %v612 = vsel %vm269, %v255, 0.0
    %613 = vadd.xlane.f32.xlu0 %v612
    %v614 = vpop.xlane.xlu0 %613
    %v615 = vsel %vm269, %v256, 0.0
    %616 = vadd.xlane.f32.xlu0 %v615
    %v617 = vpop.xlane.xlu0 %616
    %v618 = vsel %vm269, %v257, 0.0
    %619 = vadd.xlane.f32.xlu0 %v618
    %v620 = vpop.xlane.xlu0 %619
    %v621 = vsel %vm269, %v258, 0.0
    %622 = vadd.xlane.f32.xlu0 %v621
    %v623 = vpop.xlane.xlu0 %622
    %v624 = vsel %vm269, %v259, 0.0
    %625 = vadd.xlane.f32.xlu0 %v624
    %v626 = vpop.xlane.xlu0 %625
    %v627 = vsel %vm269, %v260, 0.0
    %628 = vadd.xlane.f32.xlu0 %v627
    %v629 = vpop.xlane.xlu0 %628
    %v630 = vsel %vm269, %v261, 0.0
    %631 = vadd.xlane.f32.xlu0 %v630
    %v632 = vpop.xlane.xlu0 %631
    %v633 = vsel %vm269, %v262, 0.0
    %634 = vadd.xlane.f32.xlu0 %v633
    %v635 = vpop.xlane.xlu0 %634
    %v636 = vsel %vm269, %v263, 0.0
    %637 = vadd.xlane.f32.xlu0 %v636
    %v638 = vpop.xlane.xlu0 %637
    %v639 = vsel %vm269, %v264, 0.0
    %640 = vadd.xlane.f32.xlu0 %v639
    %v641 = vpop.xlane.xlu0 %640
    %v642 = vsel %vm269, %v265, 0.0
    %643 = vadd.xlane.f32.xlu0 %v642
    %v644 = vpop.xlane.xlu0 %643
    %v645 = vsel %vm269, %v266, 0.0
    %646 = vadd.xlane.f32.xlu0 %v645
    %v647 = vpop.xlane.xlu0 %646
    %v648 = vsel %vm269, %v267, 0.0
    %649 = vadd.xlane.f32.xlu0 %v648
    %v650 = vpop.xlane.xlu0 %649
    %v651 = vsel %vm269, %v268, 0.0
    %652 = vadd.xlane.f32.xlu0 %v651
    %v653 = vpop.xlane.xlu0 %652
    %v782 = vlaneseq
    %v783 = vand.u32 %v782, 127
    %v784 = vperm.slane %v272, %v783
    %v785 = vperm.slane %v275, %v783
    %v786 = vperm.slane %v278, %v783
    %v787 = vperm.slane %v281, %v783
    %v788 = vperm.slane %v284, %v783
    %v789 = vperm.slane %v287, %v783
    %v790 = vperm.slane %v290, %v783
    %v791 = vperm.slane %v293, %v783
    %v792 = vperm.slane %v296, %v783
    %v793 = vperm.slane %v299, %v783
    %v794 = vperm.slane %v302, %v783
    %v795 = vperm.slane %v305, %v783
    %v796 = vperm.slane %v308, %v783
    %v797 = vperm.slane %v311, %v783
    %v798 = vperm.slane %v314, %v783
    %v799 = vperm.slane %v317, %v783
    %v800 = vperm.slane %v320, %v783
    %v801 = vperm.slane %v323, %v783
    %v802 = vperm.slane %v326, %v783
    %v803 = vperm.slane %v329, %v783
    %v804 = vperm.slane %v332, %v783
    %v805 = vperm.slane %v335, %v783
    %v806 = vperm.slane %v338, %v783
    %v807 = vperm.slane %v341, %v783
    %v808 = vperm.slane %v344, %v783
    %v809 = vperm.slane %v347, %v783
    %v810 = vperm.slane %v350, %v783
    %v811 = vperm.slane %v353, %v783
    %v812 = vperm.slane %v356, %v783
    %v813 = vperm.slane %v359, %v783
    %v814 = vperm.slane %v362, %v783
    %v815 = vperm.slane %v365, %v783
    %v816 = vperm.slane %v368, %v783
    %v817 = vperm.slane %v371, %v783
    %v818 = vperm.slane %v374, %v783
    %v819 = vperm.slane %v377, %v783
    %v820 = vperm.slane %v380, %v783
    %v821 = vperm.slane %v383, %v783
    %v822 = vperm.slane %v386, %v783
    %v823 = vperm.slane %v389, %v783
    %v824 = vperm.slane %v392, %v783
    %v825 = vperm.slane %v395, %v783
    %v826 = vperm.slane %v398, %v783
    %v827 = vperm.slane %v401, %v783
    %v828 = vperm.slane %v404, %v783
    %v829 = vperm.slane %v407, %v783
    %v830 = vperm.slane %v410, %v783
    %v831 = vperm.slane %v413, %v783
    %v832 = vperm.slane %v416, %v783
    %v833 = vperm.slane %v419, %v783
    %v834 = vperm.slane %v422, %v783
    %v835 = vperm.slane %v425, %v783
    %v836 = vperm.slane %v428, %v783
    %v837 = vperm.slane %v431, %v783
    %v838 = vperm.slane %v434, %v783
    %v839 = vperm.slane %v437, %v783
    %v840 = vperm.slane %v440, %v783
    %v841 = vperm.slane %v443, %v783
    %v842 = vperm.slane %v446, %v783
    %v843 = vperm.slane %v449, %v783
    %v844 = vperm.slane %v452, %v783
    %v845 = vperm.slane %v455, %v783
    %v846 = vperm.slane %v458, %v783
    %v847 = vperm.slane %v461, %v783
    %v848 = vperm.slane %v464, %v783
    %v849 = vperm.slane %v467, %v783
    %v850 = vperm.slane %v470, %v783
    %v851 = vperm.slane %v473, %v783
    %v852 = vperm.slane %v476, %v783
    %v853 = vperm.slane %v479, %v783
    %v854 = vperm.slane %v482, %v783
    %v855 = vperm.slane %v485, %v783
    %v856 = vperm.slane %v488, %v783
    %v857 = vperm.slane %v491, %v783
    %v858 = vperm.slane %v494, %v783
    %v859 = vperm.slane %v497, %v783
    %v860 = vperm.slane %v500, %v783
    %v861 = vperm.slane %v503, %v783
    %v862 = vperm.slane %v506, %v783
    %v863 = vperm.slane %v509, %v783
    %v864 = vperm.slane %v512, %v783
    %v865 = vperm.slane %v515, %v783
    %v866 = vperm.slane %v518, %v783
    %v867 = vperm.slane %v521, %v783
    %v868 = vperm.slane %v524, %v783
    %v869 = vperm.slane %v527, %v783
    %v870 = vperm.slane %v530, %v783
    %v871 = vperm.slane %v533, %v783
    %v872 = vperm.slane %v536, %v783
    %v873 = vperm.slane %v539, %v783
    %v874 = vperm.slane %v542, %v783
    %v875 = vperm.slane %v545, %v783
    %v876 = vperm.slane %v548, %v783
    %v877 = vperm.slane %v551, %v783
    %v878 = vperm.slane %v554, %v783
    %v879 = vperm.slane %v557, %v783
    %v880 = vperm.slane %v560, %v783
    %v881 = vperm.slane %v563, %v783
    %v882 = vperm.slane %v566, %v783
    %v883 = vperm.slane %v569, %v783
    %v884 = vperm.slane %v572, %v783
    %v885 = vperm.slane %v575, %v783
    %v886 = vperm.slane %v578, %v783
    %v887 = vperm.slane %v581, %v783
    %v888 = vperm.slane %v584, %v783
    %v889 = vperm.slane %v587, %v783
    %v890 = vperm.slane %v590, %v783
    %v891 = vperm.slane %v593, %v783
    %v892 = vperm.slane %v596, %v783
    %v893 = vperm.slane %v599, %v783
    %v894 = vperm.slane %v602, %v783
    %v895 = vperm.slane %v605, %v783
    %v896 = vperm.slane %v608, %v783
    %v897 = vperm.slane %v611, %v783
    %v898 = vperm.slane %v614, %v783
    %v899 = vperm.slane %v617, %v783
    %v900 = vperm.slane %v620, %v783
    %v901 = vperm.slane %v623, %v783
    %v902 = vperm.slane %v626, %v783
    %v903 = vperm.slane %v629, %v783
    %v904 = vperm.slane %v632, %v783
    %v905 = vperm.slane %v635, %v783
    %v906 = vperm.slane %v638, %v783
    %v907 = vperm.slane %v641, %v783
    %v908 = vperm.slane %v644, %v783
    %v909 = vperm.slane %v647, %v783
    %v910 = vperm.slane %v650, %v783
    %v911 = vperm.slane %v653, %v783
    %vm912 = vcmask 1041409
    %v913 = vsel %vm912, %v785, %v784
    %vm914 = vcmask 1042434
    %v915 = vsel %vm914, %v786, %v913
    %vm916 = vcmask 1043459
    %v917 = vsel %vm916, %v787, %v915
    %vm918 = vcmask 1044484
    %v919 = vsel %vm918, %v788, %v917
    %vm920 = vcmask 1045509
    %v921 = vsel %vm920, %v789, %v919
    %vm922 = vcmask 1046534
    %v923 = vsel %vm922, %v790, %v921
    %vm924 = vcmask 1047559
    %v925 = vsel %vm924, %v791, %v923
    %v926 = vsel %vm912, %v793, %v792
    %v927 = vsel %vm914, %v794, %v926
    %v928 = vsel %vm916, %v795, %v927
    %v929 = vsel %vm918, %v796, %v928
    %v930 = vsel %vm920, %v797, %v929
    %v931 = vsel %vm922, %v798, %v930
    %v932 = vsel %vm924, %v799, %v931
    %v933 = vsel %vm912, %v801, %v800
    %v934 = vsel %vm914, %v802, %v933
    %v935 = vsel %vm916, %v803, %v934
    %v936 = vsel %vm918, %v804, %v935
    %v937 = vsel %vm920, %v805, %v936
    %v938 = vsel %vm922, %v806, %v937
    %v939 = vsel %vm924, %v807, %v938
    %v940 = vsel %vm912, %v809, %v808
    %v941 = vsel %vm914, %v810, %v940
    %v942 = vsel %vm916, %v811, %v941
    %v943 = vsel %vm918, %v812, %v942
    %v944 = vsel %vm920, %v813, %v943
    %v945 = vsel %vm922, %v814, %v944
    %v946 = vsel %vm924, %v815, %v945
    %v947 = vsel %vm912, %v817, %v816
    %v948 = vsel %vm914, %v818, %v947
    %v949 = vsel %vm916, %v819, %v948
    %v950 = vsel %vm918, %v820, %v949
    %v951 = vsel %vm920, %v821, %v950
    %v952 = vsel %vm922, %v822, %v951
    %v953 = vsel %vm924, %v823, %v952
    %v954 = vsel %vm912, %v825, %v824
    %v955 = vsel %vm914, %v826, %v954
    %v956 = vsel %vm916, %v827, %v955
    %v957 = vsel %vm918, %v828, %v956
    %v958 = vsel %vm920, %v829, %v957
    %v959 = vsel %vm922, %v830, %v958
    %v960 = vsel %vm924, %v831, %v959
    %v961 = vsel %vm912, %v833, %v832
    %v962 = vsel %vm914, %v834, %v961
    %v963 = vsel %vm916, %v835, %v962
    %v964 = vsel %vm918, %v836, %v963
    %v965 = vsel %vm920, %v837, %v964
    %v966 = vsel %vm922, %v838, %v965
    %v967 = vsel %vm924, %v839, %v966
    %v968 = vsel %vm912, %v841, %v840
    %v969 = vsel %vm914, %v842, %v968
    %v970 = vsel %vm916, %v843, %v969
    %v971 = vsel %vm918, %v844, %v970
    %v972 = vsel %vm920, %v845, %v971
    %v973 = vsel %vm922, %v846, %v972
    %v974 = vsel %vm924, %v847, %v973
    %v975 = vsel %vm912, %v849, %v848
    %v976 = vsel %vm914, %v850, %v975
    %v977 = vsel %vm916, %v851, %v976
    %v978 = vsel %vm918, %v852, %v977
    %v979 = vsel %vm920, %v853, %v978
    %v980 = vsel %vm922, %v854, %v979
    %v981 = vsel %vm924, %v855, %v980
    %v982 = vsel %vm912, %v857, %v856
    %v983 = vsel %vm914, %v858, %v982
    %v984 = vsel %vm916, %v859, %v983
    %v985 = vsel %vm918, %v860, %v984
    %v986 = vsel %vm920, %v861, %v985
    %v987 = vsel %vm922, %v862, %v986
    %v988 = vsel %vm924, %v863, %v987
    %v989 = vsel %vm912, %v865, %v864
    %v990 = vsel %vm914, %v866, %v989
    %v991 = vsel %vm916, %v867, %v990
    %v992 = vsel %vm918, %v868, %v991
    %v993 = vsel %vm920, %v869, %v992
    %v994 = vsel %vm922, %v870, %v993
    %v995 = vsel %vm924, %v871, %v994
    %v996 = vsel %vm912, %v873, %v872
    %v997 = vsel %vm914, %v874, %v996
    %v998 = vsel %vm916, %v875, %v997
    %v999 = vsel %vm918, %v876, %v998
    %v1000 = vsel %vm920, %v877, %v999
    %v1001 = vsel %vm922, %v878, %v1000
    %v1002 = vsel %vm924, %v879, %v1001
    %v1003 = vsel %vm912, %v881, %v880
    %v1004 = vsel %vm914, %v882, %v1003
    %v1005 = vsel %vm916, %v883, %v1004
    %v1006 = vsel %vm918, %v884, %v1005
    %v1007 = vsel %vm920, %v885, %v1006
    %v1008 = vsel %vm922, %v886, %v1007
    %v1009 = vsel %vm924, %v887, %v1008
    %v1010 = vsel %vm912, %v889, %v888
    %v1011 = vsel %vm914, %v890, %v1010
    %v1012 = vsel %vm916, %v891, %v1011
    %v1013 = vsel %vm918, %v892, %v1012
    %v1014 = vsel %vm920, %v893, %v1013
    %v1015 = vsel %vm922, %v894, %v1014
    %v1016 = vsel %vm924, %v895, %v1015
    %v1017 = vsel %vm912, %v897, %v896
    %v1018 = vsel %vm914, %v898, %v1017
    %v1019 = vsel %vm916, %v899, %v1018
    %v1020 = vsel %vm918, %v900, %v1019
    %v1021 = vsel %vm920, %v901, %v1020
    %v1022 = vsel %vm922, %v902, %v1021
    %v1023 = vsel %vm924, %v903, %v1022
    %v1024 = vsel %vm912, %v905, %v904
    %v1025 = vsel %vm914, %v906, %v1024
    %v1026 = vsel %vm916, %v907, %v1025
    %v1027 = vsel %vm918, %v908, %v1026
    %v1028 = vsel %vm920, %v909, %v1027
    %v1029 = vsel %vm922, %v910, %v1028
    %v1030 = vsel %vm924, %v911, %v1029
    %1047 = vxpose.xlu0.b32.start [1/16] %v925, 128
    %1048 = vxpose.xlu0.b32.cont [2/16] %v932, 128
    %1049 = vxpose.xlu0.b32.cont [3/16] %v939, 128
    %1050 = vxpose.xlu0.b32.cont [4/16] %v946, 128
    %1051 = vxpose.xlu0.b32.cont [5/16] %v953, 128
    %1052 = vxpose.xlu0.b32.cont [6/16] %v960, 128
    %1053 = vxpose.xlu0.b32.cont [7/16] %v967, 128
    %1054 = vxpose.xlu0.b32.cont [8/16] %v974, 128
    %1055 = vxpose.xlu0.b32.cont [9/16] %v981, 128
    %1056 = vxpose.xlu0.b32.cont [10/16] %v988, 128
    %1057 = vxpose.xlu0.b32.cont [11/16] %v995, 128
    %1058 = vxpose.xlu0.b32.cont [12/16] %v1002, 128
    %1059 = vxpose.xlu0.b32.cont [13/16] %v1009, 128
    %1060 = vxpose.xlu0.b32.cont [14/16] %v1016, 128
    %1061 = vxpose.xlu0.b32.cont [15/16] %v1023, 128
    %1062 = vxpose.xlu0.b32.end [16/16] %v1030, 128
    %v1063 = vpop.trf.xlu0
    %v1064 = vpop.trf.xlu0
    %v1065 = vpop.trf.xlu0
    %v1066 = vpop.trf.xlu0
    %v1067 = vpop.trf.xlu0
    %v1068 = vpop.trf.xlu0
    %v1069 = vpop.trf.xlu0
    %v1070 = vpop.trf.xlu0
    %v1071 = vpop.trf.xlu0
    %v1072 = vpop.trf.xlu0
    %v1073 = vpop.trf.xlu0
    %v1074 = vpop.trf.xlu0
    %v1075 = vpop.trf.xlu0
    %v1076 = vpop.trf.xlu0
    %v1077 = vpop.trf.xlu0
    %v1078 = vpop.trf.xlu0
    %s1079 = smul.u32 0, 128
    %v1080 = vstv %s1079
    %v1081 = vadd.s32 %v1080, %v783
    %vm1082 = vcmp.lt.s32.totalorder %v1081, 8
    %v1083 = vsel %vm1082, %v1063, -inf
    %s1084 = smul.u32 0, 8
    %s1085 = scalar_lea.vmem [#allocation2], %s1084
    %1086 = vst [vmem:[%s1085] sm:$0xff] %v1083
    %p1087 = scmp.eq.s32.totalorder 0, 0
    // Predicated region
    $region10: #{tpu_custom_call.1} parent=1 // pred_check
      %p1088 = pneg %p1087
    $region11: #{tpu_custom_call.1} parent=1 // pred_check_branch
      %1090 = sbr.rel (%p1088) target = $region13
    $region12: #{tpu_custom_call.1} parent=1 // pred_region
      %v1091 = vld [vmem:[#allocation2] sm:$0xff]
      %1092 = vmax.xlane.f32.xlu0 %v1091
      %v1093 = vpop.xlane.xlu0 %1092
      %v1094 = vsub.f32 %v1091, %v1093
      %v1095 = vmul.f32 %v1094, 1.442695
      %v1096 = vpow.pop %v1095
      %1097 = vadd.xlane.f32.xlu0 %v1096
      %v1098 = vpop.xlane.xlu0 %1097
      %v1099 = vrcp.pop %v1098
      %v1100 = vmul.f32 %v1098, %v1099
      %v1101 = vsub.f32 1.0, %v1100
      %v1102 = vmul.f32 %v1099, %v1101
      %v1103 = vadd.f32 %v1099, %v1102
      %vm1104 = vweird.f32 %v1098
      %vm1105 = vweird.f32 %v1099
      %vm1106 = vmor %vm1104, %vm1105
      %v1107 = vsel %vm1106, %v1099, %v1103
      %v1108 = vand.u32 2147483647, %v1098
      %vm1109 = vcmp.eq.f32.partialorder %v1108, 8.507059e+37
      %v1110 = vand.u32 %v1098, 2147483648
      %v1111 = vor.u32 1.1754944e-38, %v1110
      %v1112 = vsel %vm1109, %v1111, %v1107
      %v1113 = vmul.f32 %v1096, %v1112
      %1114 = vst [vmem:[#allocation2] sm:$0xff] %v1113
    $region13: #{tpu_custom_call.1} parent=1 // pred_fallthru
      _
    // Predicated region
    $region14: #{tpu_custom_call.1} parent=1 // pred_check
      _
    $region15: #{tpu_custom_call.1} parent=1 // pred_check_branch
      %1116 = sbr.rel (0) target = $region17
    $region16: #{tpu_custom_call.1} parent=1 // pred_region
      %1118 = vsyncadd [#allocation3], 0
      %s1120 = sshll.u32 [#allocation2], 4
      %s1121 = int_to_ptr.vmem [resolvable:$true] %s1120
      %s1122 = sshll.u32 %s2, 4
      %s1123 = int_to_ptr.hbm [resolvable:$true] %s1122
      %1125 = dma.vmem_to_hbm [thread:$0]  %s1121, 128, %s1123, [#allocation3]
    $region17: #{tpu_custom_call.1} parent=1 // pred_fallthru
      _
    // Predicated region
    $region18: #{tpu_custom_call.1} parent=1 // pred_check
      _
    $region19: #{tpu_custom_call.1} parent=1 // pred_check_branch
      %1127 = sbr.rel (0) target = $region21
    $region20: #{tpu_custom_call.1} parent=1 // pred_region
      %1129 = dma.done [#allocation3], 128
    $region21: #{tpu_custom_call.1} parent=1 // pred_fallthru
      _
    %1130 = vsyncpa [#allocation3], 1

</llo_original>
